<compile_context>
chip_gen: v7x
topology: tpu7x:2x2x1
jax: 0.10.0
libtpu: 0.0.40
codegen_flags: <defaults>
</compile_context>

<pallas_src>
import numpy as np
import jax
import jax.numpy as jnp
from jax.experimental import pallas as pl
from jax.experimental.pallas import tpu as pltpu


def _round_up(x, m):
    return (x + m - 1) // m * m


def _stft_kernel(lo_ref, hi_ref, blo_ref, bhi_ref, out_ref):
    # Frame = [lo | hi] (two hop-sized halves). Window and imag sign are folded
    # into the basis, so this is two MXU matmuls + one add:
    #   out[:, :F_pad]        -> real part
    #   out[:, F_pad:2*F_pad] -> imag part
    out_ref[...] = (
        jnp.dot(lo_ref[...], blo_ref[...], preferred_element_type=jnp.float32)
        + jnp.dot(hi_ref[...], bhi_ref[...], preferred_element_type=jnp.float32)
    )


def make_preprocessing(input_samplerate=16000, resample_samplerate=16000,
                       window_length_ms=30, compute_dtype=jnp.bfloat16):
    assert input_samplerate == resample_samplerate, \
        "Resample with equal rates is identity; other ratios not needed here."
    n_fft = 2 * window_length_ms * resample_samplerate // 2000   # 480
    hop = n_fft // 2                                             # 240
    n_freq = n_fft // 2 + 1                                      # 241 (onesided)
    F_pad = _round_up(n_freq, 128)                               # 256
    NF2 = 2 * F_pad                                              # 512 (real|imag)

    # Windowed, sign-folded DFT basis: [w*cos | -w*sin], zero-padded to F_pad.
    n = np.arange(n_fft, dtype=np.float64)
    window = 0.5 - 0.5 * np.cos(2.0 * np.pi * n / n_fft)         # hann, periodic
    k = np.arange(n_freq, dtype=np.float64)
    ang = 2.0 * np.pi * np.outer(n, k) / n_fft                   # (n_fft, n_freq)
    basis = np.zeros((n_fft, NF2), np.float32)
    basis[:, :n_freq] = window[:, None] * np.cos(ang)
    basis[:, F_pad:F_pad + n_freq] = -window[:, None] * np.sin(ang)
    basis_lo = jnp.asarray(basis[:hop], dtype=compute_dtype)     # (240, 512)
    basis_hi = jnp.asarray(basis[hop:], dtype=compute_dtype)     # (240, 512)
    itemsize = jnp.dtype(compute_dtype).itemsize

    def forward(waveform: jax.Array) -> jax.Array:
        waveform = waveform.astype(jnp.float32)
        B, T = waveform.shape

        # --- Resample: identity (orig_freq == new_freq) ---

        # --- Framing (center=True, reflect pad). hop == n_fft/2 lets us build
        #     each frame from two contiguous hop-chunks: no gather, no padded
        #     copy of a duplicated (n_frames, n_fft) frame matrix. ---
        padded = jnp.pad(waveform, ((0, 0), (hop, hop)), mode="reflect")
        n_frames = 1 + T // hop
        chunks = padded[:, :(n_frames + 1) * hop].reshape(B, n_frames + 1, hop)
        M = B * n_frames
        lo = chunks[:, :n_frames, :].reshape(M, hop).astype(compute_dtype)
        hi = chunks[:, 1:, :].reshape(M, hop).astype(compute_dtype)

        # HBM-bound workload -> biggest block that comfortably fits VMEM.
        TM = min(1024, _round_up(M, 16))
        grid = (pl.cdiv(M, TM),)

        cost = pl.CostEstimate(
            flops=2 * M * n_fft * NF2,
            transcendentals=0,
            bytes_accessed=(2 * M * hop * itemsize          # lo + hi
                            + M * NF2 * 4                   # output (f32)
                            + n_fft * NF2 * itemsize),      # basis
        )

        out = pl.pallas_call(
            _stft_kernel,
            out_shape=jax.ShapeDtypeStruct((M, NF2), jnp.float32),
            grid_spec=pltpu.PrefetchScalarGridSpec(
                num_scalar_prefetch=0,
                grid=grid,
                in_specs=[
                    pl.BlockSpec((TM, hop), lambda i: (i, 0)),
                    pl.BlockSpec((TM, hop), lambda i: (i, 0)),
                    # Constant block index -> basis stays resident in VMEM.
                    pl.BlockSpec((hop, NF2), lambda i: (0, 0)),
                    pl.BlockSpec((hop, NF2), lambda i: (0, 0)),
                ],
                out_specs=pl.BlockSpec((TM, NF2), lambda i: (i, 0)),
            ),
            compiler_params=pltpu.CompilerParams(
                dimension_semantics=("parallel",),
                vmem_limit_bytes=64 << 20),
            cost_estimate=cost,
        )(lo, hi, basis_lo, basis_hi)

        # Complex assembly + torch layout (B, freq, time) done outside the
        # kernel (Pallas TPU has no complex dtype support).
        real = out[:, :n_freq].reshape(B, n_frames, n_freq)
        imag = out[:, F_pad:F_pad + n_freq].reshape(B, n_frames, n_freq)
        spec = (real + 1j * imag).astype(jnp.complex64)
        return jnp.transpose(spec, (0, 2, 1))

    return jax.jit(forward), n_fft, hop, n_freq


if __name__ == "__main__":
    forward, n_fft, hop, n_freq = make_preprocessing()

    key = jax.random.PRNGKey(0)
    B, T = 2, 2400                      # 2 waveforms, 2400 samples (10 hops)
    waveform = jax.random.normal(key, (B, T), dtype=jnp.float32)

    spec = jax.block_until_ready(forward(waveform))

    n_frames = 1 + T // hop
    assert spec.shape == (B, n_freq, n_frames), spec.shape
    assert spec.dtype == jnp.complex64, spec.dtype
    assert bool(jnp.all(jnp.isfinite(spec.real))) and bool(jnp.all(jnp.isfinite(spec.imag)))

    # Loose numerical check vs. a float64 DFT reference (bf16 MXU path).
    wv = np.asarray(waveform, np.float64)
    pad = np.pad(wv, ((0, 0), (hop, hop)), mode="reflect")
    idx = np.arange(n_frames)[:, None] * hop + np.arange(n_fft)[None, :]
    fr = pad[:, idx]                                   # (B, n_frames, n_fft)
    w = 0.5 - 0.5 * np.cos(2 * np.pi * np.arange(n_fft) / n_fft)
    ang_r = 2 * np.pi * np.outer(np.arange(n_freq), np.arange(n_fft)) / n_fft
    ref = np.einsum("bfn,kn->bkf", fr * w, np.exp(-1j * ang_r))
    err = float(np.max(np.abs(np.asarray(spec) - ref)))
    assert err <= 2e-2 * max(1.0, float(np.max(np.abs(ref)))), err

    print("KERNEL_OK")
</pallas_src>

<mosaic_0001>
module attributes {stable_mosaic.version = 11 : i64} {
  func.func @_stft_kernel(%arg0: i32, %arg1: memref<32x240xbf16, #tpu.memory_space<vmem>>, %arg2: memref<32x240xbf16, #tpu.memory_space<vmem>>, %arg3: memref<240x512xbf16, #tpu.memory_space<vmem>>, %arg4: memref<240x512xbf16, #tpu.memory_space<vmem>>, %arg5: memref<32x512xf32, #tpu.memory_space<vmem>>) attributes {dimension_semantics = [#tpu.dimension_semantics<parallel>], iteration_bounds = array<i64: 1>, scalar_prefetch = 0 : i64, scratch_operands = 0 : i64, tpu.core_type = #tpu.core_type<tc>, window_params = [{transform_indices = @transform_0, window_bounds = array<i64: 32, 240>}, {transform_indices = @transform_1, window_bounds = array<i64: 32, 240>}, {pipeline_mode = #tpu.pipeline_mode<synchronous>, transform_indices = @transform_2, window_bounds = array<i64: 240, 512>}, {pipeline_mode = #tpu.pipeline_mode<synchronous>, transform_indices = @transform_3, window_bounds = array<i64: 240, 512>}, {transform_indices = @transform_4, window_bounds = array<i64: 32, 512>}]} {
    %c0 = arith.constant 0 : index
    %c0_0 = arith.constant 0 : index
    %0 = vector.load %arg1[%c0, %c0_0] : memref<32x240xbf16, #tpu.memory_space<vmem>>, vector<32x240xbf16>
    %c0_1 = arith.constant 0 : index
    %c0_2 = arith.constant 0 : index
    %1 = vector.load %arg3[%c0_1, %c0_2] : memref<240x512xbf16, #tpu.memory_space<vmem>>, vector<240x512xbf16>
    %cst = arith.constant dense<0.000000e+00> : vector<32x512xf32>
    %2 = tpu.matmul %0, %1, %cst {dimension_numbers = #tpu.dot_dimension_numbers<[1], [0], [0], [1], [0, 0, 1, 1], [], []>} : vector<32x240xbf16>, vector<240x512xbf16>, vector<32x512xf32> -> vector<32x512xf32>
    %c0_3 = arith.constant 0 : index
    %c0_4 = arith.constant 0 : index
    %3 = vector.load %arg2[%c0_3, %c0_4] : memref<32x240xbf16, #tpu.memory_space<vmem>>, vector<32x240xbf16>
    %c0_5 = arith.constant 0 : index
    %c0_6 = arith.constant 0 : index
    %4 = vector.load %arg4[%c0_5, %c0_6] : memref<240x512xbf16, #tpu.memory_space<vmem>>, vector<240x512xbf16>
    %cst_7 = arith.constant dense<0.000000e+00> : vector<32x512xf32>
    %5 = tpu.matmul %3, %4, %cst_7 {dimension_numbers = #tpu.dot_dimension_numbers<[1], [0], [0], [1], [0, 0, 1, 1], [], []>} : vector<32x240xbf16>, vector<240x512xbf16>, vector<32x512xf32> -> vector<32x512xf32>
    %6 = arith.addf %2, %5 : vector<32x512xf32>
    %c0_8 = arith.constant 0 : index
    %c0_9 = arith.constant 0 : index
    %7 = vector.load %arg5[%c0_8, %c0_9] : memref<32x512xf32, #tpu.memory_space<vmem>>, vector<32x512xf32>
    tpu.vector_store %arg5[%c0_8, %c0_9], %6 {strides = array<i32>} : memref<32x512xf32, #tpu.memory_space<vmem>>, vector<32x512xf32>,
    return
  }
  func.func @transform_0(%arg0: i32) -> (i32, i32) {
    %c0_i32 = arith.constant 0 : i32
    %c0_i32_0 = arith.constant 0 : i32
    return %arg0, %c0_i32 : i32, i32
  }
  func.func @transform_1(%arg0: i32) -> (i32, i32) {
    %c0_i32 = arith.constant 0 : i32
    %c0_i32_0 = arith.constant 0 : i32
    return %arg0, %c0_i32 : i32, i32
  }
  func.func @transform_2(%arg0: i32) -> (i32, i32) {
    %c0_i32 = arith.constant 0 : i32
    %c0_i32_0 = arith.constant 0 : i32
    %c0_i32_1 = arith.constant 0 : i32
    return %c0_i32, %c0_i32_0 : i32, i32
  }
  func.func @transform_3(%arg0: i32) -> (i32, i32) {
    %c0_i32 = arith.constant 0 : i32
    %c0_i32_0 = arith.constant 0 : i32
    %c0_i32_1 = arith.constant 0 : i32
    return %c0_i32, %c0_i32_0 : i32, i32
  }
  func.func @transform_4(%arg0: i32) -> (i32, i32) {
    %c0_i32 = arith.constant 0 : i32
    %c0_i32_0 = arith.constant 0 : i32
    return %arg0, %c0_i32 : i32, i32
  }
}

</mosaic_0001>

<llo_original>
// kernel: reverse.1
$region0: #{reverse.1}
  %s0 = inlined_call_operand.vmem [shape: bf16[2,256], index: 0, kind: input, shape index: {}]
  %s1 = inlined_call_operand.vmem [shape: bf16[2,256], index: 1, kind: output, shape index: {}]
  %v2 = vlaneseq
  %v3 = vsub.s32 127, %v2
  %4 = vset.pattern.permute.xlu0 %v3
  $region1: #{reverse.1} parent=0
    #allocation0 [shape = 'u8[4096]{0}', space=vmem, size = 0x1000, scoped, tag = 'operand span for operand 0']
    #allocation1 [shape = 'u8[1024]{0}', space=vmem, size = 0x400, scoped, tag = 'packed  for operand 0']
    #allocation2 [shape = 'u8[4096]{0}', space=vmem, size = 0x1000, scoped, tag = 'operand span for operand 1']
    #allocation3 [shape = 'u8[1024]{0}', space=vmem, size = 0x400, scoped, tag = 'packed  for operand 1']
    loop: start=0, step=1, limit=4
    $region2: #{reverse.1} parent=1 // loop_pre_header
      _
    $region3: #{reverse.1} parent=1 // loop_header
      %s6 = sphi 0, %s10
      %p7 = scmp.ge.s32.totalorder %s6, 4
      %s13 = sphi 0, %s25
      %s14 = sphi 0, %s21
      %s15 = sphi 0, %s13
      %s16 = sphi 0, %s14
      %s17 = sphi 0, %s15
      %s18 = sphi 0, %s16
    $region4: #{reverse.1} parent=1 // loop_header_branch
      %9 = sbr.rel (%p7) target = $region8
    $region5: #{reverse.1} parent=1 // loop_body
      %s11 = ssub.s32 %s6, 1
      %s12 = ssub.s32 %s6, 2
      %s19 = sadd.s32 1, %s14
      %p20 = scmp.ge.s32.totalorder %s19, 2
      %s21 = scalar_select %p20, 0, %s19
      %s22 = sadd.s32 1, %s13
      %s23 = scalar_select %p20, %s22, %s13
      %p24 = scmp.ge.s32.totalorder %s23, 1
      %s25 = scalar_select %p24, 0, %s23
      %p26 = scmp.le.s32.totalorder 1, %s6
      %p27 = scmp.lt.s32.totalorder %s6, 3
      %p28 = pnand %p26, %p27
      %p29 = pneg %p28
      // Predicated region
      $region9: #{reverse.1} parent=5 // pred_check
        _
      $region10: #{reverse.1} parent=5 // pred_check_branch
        %31 = sbr.rel (%p28) target = $region12
      $region11: #{reverse.1} parent=5 // pred_region
        %s32 = ssub.s32 %s6, 1
      $region12: #{reverse.1} parent=5 // pred_fallthru
        _
      %p33 = scmp.lt.s32.totalorder %s6, 2
      // Predicated region
      $region13: #{reverse.1} parent=5 // pred_check
        %p34 = pneg %p33
      $region14: #{reverse.1} parent=5 // pred_check_branch
        %36 = sbr.rel (%p34) target = $region16
      $region15: #{reverse.1} parent=5 // pred_region
        %s37 = sand.u32 %s6, 1
        %s38 = sand.u32 %s6, 1
        %s39 = scalar_lea.vmem [#allocation1], %s38
        %s40 = ssub.s32 1, %s14
        %s41 = smul.addr %s13, 2
        %s42 = sadd.s32 %s40, %s41
        %s43 = scalar_lea.vmem %s0, %s42
        // Predicated region
        $region17: #{reverse.1} parent=15 // pred_check
          _
        $region18: #{reverse.1} parent=15 // pred_check_branch
          %45 = sbr.rel (0) target = $region20
        $region19: #{reverse.1} parent=15 // pred_region
          // Predicated region
          $region21: #{reverse.1} parent=19 // pred_check
            _
          $region22: #{reverse.1} parent=19 // pred_check_branch
            %47 = sbr.rel target = $region24
          $region23: #{reverse.1} parent=19 // pred_region
            // Predicated region
            $region36: #{reverse.1} parent=23 // pred_check
              _
            $region37: #{reverse.1} parent=23 // pred_check_branch
              %62 = sbr.rel (0) target = $region39
            $region38: #{reverse.1} parent=23 // pred_region
              loop: start=0, step=1, limit=1
              $region40: #{reverse.1} parent=38 // loop_pre_header
                _
              $region41: #{reverse.1} parent=38 // loop_header
                %s65 = sphi 0, %s69
                %p66 = scmp.ge.s32.totalorder %s65, 1
                %s70 = sphi %s43, %s43
                %s71 = sphi %s39, %s39
              $region42: #{reverse.1} parent=38 // loop_header_branch
                %68 = sbr.rel (%p66) target = $region46
              $region43: #{reverse.1} parent=38 // loop_body
                %v72 = vld [vmem:[%s70] sm:$0x1]
                %73 = vst [vmem:[%s71] sm:$0x1] %v72
              $region44: #{reverse.1} parent=38 // loop_footer
                %s69 = sadd.s32 1, %s65
              $region45: #{reverse.1} parent=38 // loop_footer_branch
                %64 = sbr.rel target = $region41
              $region46: #{reverse.1} parent=38 // loop_exit
                _
            $region39: #{reverse.1} parent=23 // pred_fallthru
              _
          $region24: #{reverse.1} parent=19 // pred_fallthru
            _
          // Predicated region
          $region25: #{reverse.1} parent=19 // pred_check
            _
          $region26: #{reverse.1} parent=19 // pred_check_branch
            %49 = sbr.rel (0) target = $region28
          $region27: #{reverse.1} parent=19 // pred_region
            loop: start=0, step=1, limit=1
            $region29: #{reverse.1} parent=27 // loop_pre_header
              _
            $region30: #{reverse.1} parent=27 // loop_header
              %s52 = sphi 0, %s56
              %p53 = scmp.ge.s32.totalorder %s52, 1
              %s57 = sphi %s43, %s43
              %s58 = sphi %s39, %s39
            $region31: #{reverse.1} parent=27 // loop_header_branch
              %55 = sbr.rel (%p53) target = $region35
            $region32: #{reverse.1} parent=27 // loop_body
              %v59 = vld [vmem:[%s57] sm:$0x1]
              %60 = vst [vmem:[%s58] sm:$0x1] %v59
            $region33: #{reverse.1} parent=27 // loop_footer
              %s56 = sadd.s32 1, %s52
            $region34: #{reverse.1} parent=27 // loop_footer_branch
              %51 = sbr.rel target = $region30
            $region35: #{reverse.1} parent=27 // loop_exit
              _
          $region28: #{reverse.1} parent=19 // pred_fallthru
            _
        $region20: #{reverse.1} parent=15 // pred_fallthru
          _
        %74 = vnop
      $region16: #{reverse.1} parent=5 // pred_fallthru
        _
      %p75 = scmp.le.s32.totalorder 1, %s6
      %p76 = scmp.lt.s32.totalorder %s6, 3
      %p77 = pnand %p75, %p76
      %p78 = pneg %p77
      // Predicated region
      $region47: #{reverse.1} parent=5 // pred_check
        _
      $region48: #{reverse.1} parent=5 // pred_check_branch
        %80 = sbr.rel (%p77) target = $region50
      $region49: #{reverse.1} parent=5 // pred_region
        %s81 = ssub.s32 %s6, 1
        %s82 = sand.u32 %s11, 1
        %s83 = sand.u32 %s11, 1
        %s84 = scalar_lea.vmem [#allocation1], %s83
        %s85 = sand.u32 %s11, 1
        %s86 = sand.u32 %s11, 1
        %s87 = scalar_lea.vmem [#allocation1], %s86
        %s88 = sand.u32 %s11, 1
        %s89 = sand.u32 %s11, 1
        %s90 = scalar_lea.vmem [#allocation3], %s89
        %s92 = smul.u32 1, 2
        %s93 = sshllo.u32 0, %s92
        %s94 = sshrl.u32 %s93, 1
        %s95 = sor.u32 %s93, %s94
        %s96 = sand.u32 %s95, 85
        %s97 = sshrl.u32 %s96, 1
        %s98 = sor.u32 %s96, %s97
        %s99 = sand.u32 51, %s98
        %s100 = sshrl.u32 %s99, 2
        %s101 = sor.u32 %s99, %s100
        %s102 = sand.u32 15, %s101
        %v103 = vld [vmem:[%s87] sm:%s102]
        %v104 = vunpack.c.l.bf16 %v103
        %v105 = vunpack.c.h.bf16 %v103
        %106 = vst [vmem:[#allocation0] sm:%s93] %v104
        %s107 = ssub.s32 1, %s16
        %v108 = vld [vmem:[#allocation0] sm:$0xff]
        %109 = vperm.xlu0 %4, %v108
        %v110 = vpop.permute.xlu0 %109
        %111 = vst [vmem:[#allocation2] sm:$0xff] %v110
        %s113 = smul.u32 1, 2
        %s114 = sshllo.u32 0, %s113
        %s115 = sshrl.u32 %s113, 1
        %v116 = vld [vmem:[#allocation2] sm:%s114]
        %v117 = vpack.c.bf16 0.0, %v116
        %s118 = sshllo.u32 0, %s115
        %119 = vst [vmem:[%s90] sm:%s118] %v117
        %s120 = sand.u32 %s11, 1
        %s121 = sand.u32 %s11, 1
        %s122 = scalar_lea.vmem [#allocation3], %s121
        %s123 = smul.addr %s15, 2
        %s124 = sadd.s32 %s16, %s123
        %s125 = scalar_lea.vmem %s1, %s124
        // Predicated region
        $region51: #{reverse.1} parent=49 // pred_check
          _
        $region52: #{reverse.1} parent=49 // pred_check_branch
          %127 = sbr.rel (0) target = $region54
        $region53: #{reverse.1} parent=49 // pred_region
          // Predicated region
          $region55: #{reverse.1} parent=53 // pred_check
            _
          $region56: #{reverse.1} parent=53 // pred_check_branch
            %129 = sbr.rel target = $region58
          $region57: #{reverse.1} parent=53 // pred_region
            // Predicated region
            $region70: #{reverse.1} parent=57 // pred_check
              _
            $region71: #{reverse.1} parent=57 // pred_check_branch
              %144 = sbr.rel (0) target = $region73
            $region72: #{reverse.1} parent=57 // pred_region
              loop: start=0, step=1, limit=1
              $region74: #{reverse.1} parent=72 // loop_pre_header
                _
              $region75: #{reverse.1} parent=72 // loop_header
                %s147 = sphi 0, %s151
                %p148 = scmp.ge.s32.totalorder %s147, 1
                %s152 = sphi %s122, %s122
                %s153 = sphi %s125, %s125
              $region76: #{reverse.1} parent=72 // loop_header_branch
                %150 = sbr.rel (%p148) target = $region80
              $region77: #{reverse.1} parent=72 // loop_body
                %v154 = vld [vmem:[%s152] sm:$0x1]
                %155 = vst [vmem:[%s153] sm:$0x1] %v154
              $region78: #{reverse.1} parent=72 // loop_footer
                %s151 = sadd.s32 1, %s147
              $region79: #{reverse.1} parent=72 // loop_footer_branch
                %146 = sbr.rel target = $region75
              $region80: #{reverse.1} parent=72 // loop_exit
                _
            $region73: #{reverse.1} parent=57 // pred_fallthru
              _
          $region58: #{reverse.1} parent=53 // pred_fallthru
            _
          // Predicated region
          $region59: #{reverse.1} parent=53 // pred_check
            _
          $region60: #{reverse.1} parent=53 // pred_check_branch
            %131 = sbr.rel (0) target = $region62
          $region61: #{reverse.1} parent=53 // pred_region
            loop: start=0, step=1, limit=1
            $region63: #{reverse.1} parent=61 // loop_pre_header
              _
            $region64: #{reverse.1} parent=61 // loop_header
              %s134 = sphi 0, %s138
              %p135 = scmp.ge.s32.totalorder %s134, 1
              %s139 = sphi %s122, %s122
              %s140 = sphi %s125, %s125
            $region65: #{reverse.1} parent=61 // loop_header_branch
              %137 = sbr.rel (%p135) target = $region69
            $region66: #{reverse.1} parent=61 // loop_body
              %v141 = vld [vmem:[%s139] sm:$0x1]
              %142 = vst [vmem:[%s140] sm:$0x1] %v141
            $region67: #{reverse.1} parent=61 // loop_footer
              %s138 = sadd.s32 1, %s134
            $region68: #{reverse.1} parent=61 // loop_footer_branch
              %133 = sbr.rel target = $region64
            $region69: #{reverse.1} parent=61 // loop_exit
              _
          $region62: #{reverse.1} parent=53 // pred_fallthru
            _
        $region54: #{reverse.1} parent=49 // pred_fallthru
          _
        %156 = vnop
      $region50: #{reverse.1} parent=5 // pred_fallthru
        _
      %p157 = scmp.le.s32.totalorder 2, %s6
      // Predicated region
      $region81: #{reverse.1} parent=5 // pred_check
        %p158 = pneg %p157
      $region82: #{reverse.1} parent=5 // pred_check_branch
        %160 = sbr.rel (%p158) target = $region84
      $region83: #{reverse.1} parent=5 // pred_region
        %s161 = ssub.s32 %s6, 2
        %s162 = sand.u32 %s12, 1
        %s163 = sand.u32 %s12, 1
        %s164 = scalar_lea.vmem [#allocation3], %s163
      $region84: #{reverse.1} parent=5 // pred_fallthru
        _
    $region6: #{reverse.1} parent=1 // loop_footer
      %s10 = sadd.s32 1, %s6
    $region7: #{reverse.1} parent=1 // loop_footer_branch
      %5 = sbr.rel target = $region3
    $region8: #{reverse.1} parent=1 // loop_exit
      _

// kernel: custom-call
$region0: #{custom-call}
  %s0 = inlined_call_operand.vmem [shape: f32[2,241,11], index: 0, kind: input, shape index: {}]
  %s1 = inlined_call_operand.vmem [shape: f32[2,241,11], index: 1, kind: input, shape index: {}]
  %s2 = inlined_call_operand.vmem [shape: c64[2,241,11], index: 2, kind: output, shape index: {}]
  %s4 = scalar_lea.vmem %s2, 64
  %v5 = vld [vmem:[%s0] sm:$0xff]
  %6 = vst [vmem:[%s2] sm:$0xff] %v5
  %s7 = scalar_lea.vmem %s2, 8
  %s8 = scalar_lea.vmem %s0, 8
  %v9 = vld [vmem:[%s8] sm:$0xff]
  %10 = vst [vmem:[%s7] sm:$0xff] %v9
  %s11 = scalar_lea.vmem %s2, 16
  %s12 = scalar_lea.vmem %s0, 16
  %v13 = vld [vmem:[%s12] sm:$0xff]
  %14 = vst [vmem:[%s11] sm:$0xff] %v13
  %s15 = scalar_lea.vmem %s2, 24
  %s16 = scalar_lea.vmem %s0, 24
  %v17 = vld [vmem:[%s16] sm:$0xff]
  %18 = vst [vmem:[%s15] sm:$0xff] %v17
  %s19 = scalar_lea.vmem %s2, 32
  %s20 = scalar_lea.vmem %s0, 32
  %v21 = vld [vmem:[%s20] sm:$0xff]
  %22 = vst [vmem:[%s19] sm:$0xff] %v21
  %s23 = scalar_lea.vmem %s2, 40
  %s24 = scalar_lea.vmem %s0, 40
  %v25 = vld [vmem:[%s24] sm:$0xff]
  %26 = vst [vmem:[%s23] sm:$0xff] %v25
  %s27 = scalar_lea.vmem %s2, 48
  %s28 = scalar_lea.vmem %s0, 48
  %v29 = vld [vmem:[%s28] sm:$0xff]
  %30 = vst [vmem:[%s27] sm:$0xff] %v29
  %s31 = scalar_lea.vmem %s2, 56
  %s32 = scalar_lea.vmem %s0, 56
  %v33 = vld [vmem:[%s32] sm:$0xff]
  %34 = vst [vmem:[%s31] sm:$0xff] %v33
  %v35 = vld [vmem:[%s1] sm:$0xff]
  %36 = vst [vmem:[%s4] sm:$0xff] %v35
  %s37 = scalar_lea.vmem %s4, 8
  %s38 = scalar_lea.vmem %s1, 8
  %v39 = vld [vmem:[%s38] sm:$0xff]
  %40 = vst [vmem:[%s37] sm:$0xff] %v39
  %s41 = scalar_lea.vmem %s4, 16
  %s42 = scalar_lea.vmem %s1, 16
  %v43 = vld [vmem:[%s42] sm:$0xff]
  %44 = vst [vmem:[%s41] sm:$0xff] %v43
  %s45 = scalar_lea.vmem %s4, 24
  %s46 = scalar_lea.vmem %s1, 24
  %v47 = vld [vmem:[%s46] sm:$0xff]
  %48 = vst [vmem:[%s45] sm:$0xff] %v47
  %s49 = scalar_lea.vmem %s4, 32
  %s50 = scalar_lea.vmem %s1, 32
  %v51 = vld [vmem:[%s50] sm:$0xff]
  %52 = vst [vmem:[%s49] sm:$0xff] %v51
  %s53 = scalar_lea.vmem %s4, 40
  %s54 = scalar_lea.vmem %s1, 40
  %v55 = vld [vmem:[%s54] sm:$0xff]
  %56 = vst [vmem:[%s53] sm:$0xff] %v55
  %s57 = scalar_lea.vmem %s4, 48
  %s58 = scalar_lea.vmem %s1, 48
  %v59 = vld [vmem:[%s58] sm:$0xff]
  %60 = vst [vmem:[%s57] sm:$0xff] %v59
  %s61 = scalar_lea.vmem %s4, 56
  %s62 = scalar_lea.vmem %s1, 56
  %v63 = vld [vmem:[%s62] sm:$0xff]
  %64 = vst [vmem:[%s61] sm:$0xff] %v63

// kernel: forward.1
$region0: #{forward.1}
  #allocation0 [shape = 'u32[]', space=smem, size = 0x4, offset = 0x4, fixed_abs, tag = 'smem constant byte address 0x4 - core index']
  #allocation1 [shape = 'u32[144,128]{1,0:T(1,128)}', space=vmem, size = 0x12000, scoped, tag = 'internal scratch']
  %s0 = inlined_call_operand.hbm [shape: bf16[22,240], index: 0, kind: input, shape index: {}]
  %s1 = inlined_call_operand.hbm [shape: bf16[22,240], index: 1, kind: input, shape index: {}]
  %s2 = inlined_call_operand.hbm [shape: bf16[240,512], index: 2, kind: input, shape index: {}]
  %s3 = inlined_call_operand.hbm [shape: bf16[240,512], index: 3, kind: input, shape index: {}]
  %s4 = inlined_call_operand.hbm [shape: f32[22,512], index: 4, kind: output, shape index: {}]
  %s5 = sld [smem:[#allocation0]]
  $region42: #{forward.1} parent=0
    _
  %s7 = ssub.s32 1, %s5
  %s8 = scalar_select 0, %s7, %s5
  $region1: #{forward.1} parent=0
    #allocation2 [shape = 'u8[16384]{0}', space=vmem, size = 0x4000, scoped, tag = 'input window, operand 0, single buffered']
    #allocation3 [shape = 's32[1]{0}', space=sflag, size = 0x4, scoped, tag = 'scoped memory for forward.1']
    #allocation4 [shape = 's32[1]{0}', space=sflag, size = 0x4, scoped, tag = 'scoped memory for forward.1']
    #allocation5 [shape = 'u8[16384]{0}', space=vmem, size = 0x4000, scoped, tag = 'input window, operand 1, single buffered']
    #allocation6 [shape = 's32[1]{0}', space=sflag, size = 0x4, scoped, tag = 'scoped memory for forward.1']
    #allocation7 [shape = 'u8[245760]{0}', space=vmem, size = 0x3c000, scoped, tag = 'input window, operand 2, single buffered']
    #allocation8 [shape = 'u8[245760]{0}', space=vmem, size = 0x3c000, scoped, tag = 'input window, operand 3, single buffered']
    #allocation9 [shape = 's32[1]{0}', space=sflag, size = 0x4, scoped, tag = 'scoped memory for forward.1']
    #allocation10 [shape = 'u8[65536]{0}', space=vmem, size = 0x10000, scoped, tag = 'output window, operand 0, single buffered']
    %9 = vsyncpa [#allocation3], 0
    %10 = vsyncpa [#allocation6], 0
    %11 = vsyncpa [#allocation9], 0
    %12 = vsyncpa [#allocation4], 0
    // Predicated region
    $region2: #{forward.1} parent=1 // pred_check
      _
    $region3: #{forward.1} parent=1 // pred_check_branch
      %14 = sbr.rel (0) target = $region5
    $region4: #{forward.1} parent=1 // pred_region
      %s16 = ssub.s32 512, 384
      %17 = vsyncadd [#allocation3], %s16
      %s18 = sshll.u32 [#allocation2], 4
      %s19 = int_to_ptr.vmem [resolvable:$true] %s18
      %24 = dma.hbm_to_vmem [thread:$0]  %s0, 384, %s19, [#allocation3], 128, 128, 8
    $region5: #{forward.1} parent=1 // pred_fallthru
      _
    // Predicated region
    $region6: #{forward.1} parent=1 // pred_check
      _
    $region7: #{forward.1} parent=1 // pred_check_branch
      %26 = sbr.rel (0) target = $region9
    $region8: #{forward.1} parent=1 // pred_region
      %s28 = ssub.s32 512, 384
      %29 = vsyncadd [#allocation6], %s28
      %s30 = sshll.u32 [#allocation5], 4
      %s31 = int_to_ptr.vmem [resolvable:$true] %s30
      %36 = dma.hbm_to_vmem [thread:$0]  %s1, 384, %s31, [#allocation6], 128, 128, 8
    $region9: #{forward.1} parent=1 // pred_fallthru
      _
    // Predicated region
    $region10: #{forward.1} parent=1 // pred_check
      _
    $region11: #{forward.1} parent=1 // pred_check_branch
      %38 = sbr.rel (0) target = $region13
    $region12: #{forward.1} parent=1 // pred_region
      %s40 = ssub.s32 7680, 7680
      %41 = vsyncadd [#allocation6], %s40
      %s42 = sshll.u32 [#allocation7], 4
      %s43 = int_to_ptr.vmem [resolvable:$true] %s42
      %48 = dma.hbm_to_vmem [thread:$0]  %s2, 7680, %s43, [#allocation6], 256, 256, 16
    $region13: #{forward.1} parent=1 // pred_fallthru
      _
    // Predicated region
    $region14: #{forward.1} parent=1 // pred_check
      _
    $region15: #{forward.1} parent=1 // pred_check_branch
      %50 = sbr.rel (0) target = $region17
    $region16: #{forward.1} parent=1 // pred_region
      %s52 = ssub.s32 7680, 7680
      %53 = vsyncadd [#allocation9], %s52
      %s54 = sshll.u32 [#allocation8], 4
      %s55 = int_to_ptr.vmem [resolvable:$true] %s54
      %60 = dma.hbm_to_vmem [thread:$0]  %s3, 7680, %s55, [#allocation9], 256, 256, 16
    $region17: #{forward.1} parent=1 // pred_fallthru
      _
    // Predicated region
    $region18: #{forward.1} parent=1 // pred_check
      _
    $region19: #{forward.1} parent=1 // pred_check_branch
      %62 = sbr.rel (0) target = $region21
    $region20: #{forward.1} parent=1 // pred_region
      %63 = dma.done [#allocation3], 512
    $region21: #{forward.1} parent=1 // pred_fallthru
      _
    // Predicated region
    $region22: #{forward.1} parent=1 // pred_check
      _
    $region23: #{forward.1} parent=1 // pred_check_branch
      %65 = sbr.rel (0) target = $region25
    $region24: #{forward.1} parent=1 // pred_region
      %66 = dma.done [#allocation6], 512
    $region25: #{forward.1} parent=1 // pred_fallthru
      _
    // Predicated region
    $region26: #{forward.1} parent=1 // pred_check
      _
    $region27: #{forward.1} parent=1 // pred_check_branch
      %68 = sbr.rel (0) target = $region29
    $region28: #{forward.1} parent=1 // pred_region
      %69 = dma.done [#allocation6], 7680
    $region29: #{forward.1} parent=1 // pred_fallthru
      _
    // Predicated region
    $region30: #{forward.1} parent=1 // pred_check
      _
    $region31: #{forward.1} parent=1 // pred_check_branch
      %71 = sbr.rel (0) target = $region33
    $region32: #{forward.1} parent=1 // pred_region
      %72 = dma.done [#allocation9], 7680
    $region33: #{forward.1} parent=1 // pred_fallthru
      _
    %v74 = vld [vmem:[#allocation2] sm:$0xff]
    %v75 = vld [vmem:[#allocation2 + $0x8] sm:$0xff]
    %v76 = vld [vmem:[#allocation2 + $0x10] sm:$0xff]
    %v77 = vld [vmem:[#allocation2 + $0x18] sm:$0xff]
    %v78 = vld [vmem:[#allocation7] sm:$0xff]
    %v79 = vld [vmem:[#allocation7 + $0x8] sm:$0xff]
    %v80 = vld [vmem:[#allocation7 + $0x10] sm:$0xff]
    %v81 = vld [vmem:[#allocation7 + $0x18] sm:$0xff]
    %v82 = vld [vmem:[#allocation7 + $0x20] sm:$0xff]
    %v83 = vld [vmem:[#allocation7 + $0x28] sm:$0xff]
    %v84 = vld [vmem:[#allocation7 + $0x30] sm:$0xff]
    %v85 = vld [vmem:[#allocation7 + $0x38] sm:$0xff]
    %v86 = vld [vmem:[#allocation7 + $0x40] sm:$0xff]
    %v87 = vld [vmem:[#allocation7 + $0x48] sm:$0xff]
    %v88 = vld [vmem:[#allocation7 + $0x50] sm:$0xff]
    %v89 = vld [vmem:[#allocation7 + $0x58] sm:$0xff]
    %v90 = vld [vmem:[#allocation7 + $0x60] sm:$0xff]
    %v91 = vld [vmem:[#allocation7 + $0x68] sm:$0xff]
    %v92 = vld [vmem:[#allocation7 + $0x70] sm:$0xff]
    %v93 = vld [vmem:[#allocation7 + $0x78] sm:$0xff]
    %v94 = vld [vmem:[#allocation7 + $0x80] sm:$0xff]
    %v95 = vld [vmem:[#allocation7 + $0x88] sm:$0xff]
    %v96 = vld [vmem:[#allocation7 + $0x90] sm:$0xff]
    %v97 = vld [vmem:[#allocation7 + $0x98] sm:$0xff]
    %v98 = vld [vmem:[#allocation7 + $0xa0] sm:$0xff]
    %v99 = vld [vmem:[#allocation7 + $0xa8] sm:$0xff]
    %v100 = vld [vmem:[#allocation7 + $0xb0] sm:$0xff]
    %v101 = vld [vmem:[#allocation7 + $0xb8] sm:$0xff]
    %v102 = vld [vmem:[#allocation7 + $0xc0] sm:$0xff]
    %v103 = vld [vmem:[#allocation7 + $0xc8] sm:$0xff]
    %v104 = vld [vmem:[#allocation7 + $0xd0] sm:$0xff]
    %v105 = vld [vmem:[#allocation7 + $0xd8] sm:$0xff]
    %v106 = vld [vmem:[#allocation7 + $0xe0] sm:$0xff]
    %v107 = vld [vmem:[#allocation7 + $0xe8] sm:$0xff]
    %v108 = vld [vmem:[#allocation7 + $0xf0] sm:$0xff]
    %v109 = vld [vmem:[#allocation7 + $0xf8] sm:$0xff]
    %v110 = vld [vmem:[#allocation7 + $0x100] sm:$0xff]
    %v111 = vld [vmem:[#allocation7 + $0x108] sm:$0xff]
    %v112 = vld [vmem:[#allocation7 + $0x110] sm:$0xff]
    %v113 = vld [vmem:[#allocation7 + $0x118] sm:$0xff]
    %v114 = vld [vmem:[#allocation7 + $0x120] sm:$0xff]
    %v115 = vld [vmem:[#allocation7 + $0x128] sm:$0xff]
    %v116 = vld [vmem:[#allocation7 + $0x130] sm:$0xff]
    %v117 = vld [vmem:[#allocation7 + $0x138] sm:$0xff]
    %v118 = vld [vmem:[#allocation7 + $0x140] sm:$0xff]
    %v119 = vld [vmem:[#allocation7 + $0x148] sm:$0xff]
    %v120 = vld [vmem:[#allocation7 + $0x150] sm:$0xff]
    %v121 = vld [vmem:[#allocation7 + $0x158] sm:$0xff]
    %v122 = vld [vmem:[#allocation7 + $0x160] sm:$0xff]
    %v123 = vld [vmem:[#allocation7 + $0x168] sm:$0xff]
    %v124 = vld [vmem:[#allocation7 + $0x170] sm:$0xff]
    %v125 = vld [vmem:[#allocation7 + $0x178] sm:$0xff]
    %v126 = vld [vmem:[#allocation7 + $0x180] sm:$0xff]
    %v127 = vld [vmem:[#allocation7 + $0x188] sm:$0xff]
    %v128 = vld [vmem:[#allocation7 + $0x190] sm:$0xff]
    %v129 = vld [vmem:[#allocation7 + $0x198] sm:$0xff]
    %v130 = vld [vmem:[#allocation7 + $0x1a0] sm:$0xff]
    %v131 = vld [vmem:[#allocation7 + $0x1a8] sm:$0xff]
    %v132 = vld [vmem:[#allocation7 + $0x1b0] sm:$0xff]
    %v133 = vld [vmem:[#allocation7 + $0x1b8] sm:$0xff]
    %v134 = vld [vmem:[#allocation7 + $0x1c0] sm:$0xff]
    %v135 = vld [vmem:[#allocation7 + $0x1c8] sm:$0xff]
    %v136 = vld [vmem:[#allocation7 + $0x1d0] sm:$0xff]
    %v137 = vld [vmem:[#allocation7 + $0x1d8] sm:$0xff]
    %v138 = vld [vmem:[#allocation5] sm:$0xff]
    %v139 = vld [vmem:[#allocation5 + $0x8] sm:$0xff]
    %v140 = vld [vmem:[#allocation5 + $0x10] sm:$0xff]
    %v141 = vld [vmem:[#allocation5 + $0x18] sm:$0xff]
    %v142 = vld [vmem:[#allocation8] sm:$0xff]
    %v143 = vld [vmem:[#allocation8 + $0x8] sm:$0xff]
    %v144 = vld [vmem:[#allocation8 + $0x10] sm:$0xff]
    %v145 = vld [vmem:[#allocation8 + $0x18] sm:$0xff]
    %v146 = vld [vmem:[#allocation8 + $0x20] sm:$0xff]
    %v147 = vld [vmem:[#allocation8 + $0x28] sm:$0xff]
    %v148 = vld [vmem:[#allocation8 + $0x30] sm:$0xff]
    %v149 = vld [vmem:[#allocation8 + $0x38] sm:$0xff]
    %v150 = vld [vmem:[#allocation8 + $0x40] sm:$0xff]
    %v151 = vld [vmem:[#allocation8 + $0x48] sm:$0xff]
    %v152 = vld [vmem:[#allocation8 + $0x50] sm:$0xff]
    %v153 = vld [vmem:[#allocation8 + $0x58] sm:$0xff]
    %v154 = vld [vmem:[#allocation8 + $0x60] sm:$0xff]
    %v155 = vld [vmem:[#allocation8 + $0x68] sm:$0xff]
    %v156 = vld [vmem:[#allocation8 + $0x70] sm:$0xff]
    %v157 = vld [vmem:[#allocation8 + $0x78] sm:$0xff]
    %v158 = vld [vmem:[#allocation8 + $0x80] sm:$0xff]
    %v159 = vld [vmem:[#allocation8 + $0x88] sm:$0xff]
    %v160 = vld [vmem:[#allocation8 + $0x90] sm:$0xff]
    %v161 = vld [vmem:[#allocation8 + $0x98] sm:$0xff]
    %v162 = vld [vmem:[#allocation8 + $0xa0] sm:$0xff]
    %v163 = vld [vmem:[#allocation8 + $0xa8] sm:$0xff]
    %v164 = vld [vmem:[#allocation8 + $0xb0] sm:$0xff]
    %v165 = vld [vmem:[#allocation8 + $0xb8] sm:$0xff]
    %v166 = vld [vmem:[#allocation8 + $0xc0] sm:$0xff]
    %v167 = vld [vmem:[#allocation8 + $0xc8] sm:$0xff]
    %v168 = vld [vmem:[#allocation8 + $0xd0] sm:$0xff]
    %v169 = vld [vmem:[#allocation8 + $0xd8] sm:$0xff]
    %v170 = vld [vmem:[#allocation8 + $0xe0] sm:$0xff]
    %v171 = vld [vmem:[#allocation8 + $0xe8] sm:$0xff]
    %v172 = vld [vmem:[#allocation8 + $0xf0] sm:$0xff]
    %v173 = vld [vmem:[#allocation8 + $0xf8] sm:$0xff]
    %v174 = vld [vmem:[#allocation8 + $0x100] sm:$0xff]
    %v175 = vld [vmem:[#allocation8 + $0x108] sm:$0xff]
    %v176 = vld [vmem:[#allocation8 + $0x110] sm:$0xff]
    %v177 = vld [vmem:[#allocation8 + $0x118] sm:$0xff]
    %v178 = vld [vmem:[#allocation8 + $0x120] sm:$0xff]
    %v179 = vld [vmem:[#allocation8 + $0x128] sm:$0xff]
    %v180 = vld [vmem:[#allocation8 + $0x130] sm:$0xff]
    %v181 = vld [vmem:[#allocation8 + $0x138] sm:$0xff]
    %v182 = vld [vmem:[#allocation8 + $0x140] sm:$0xff]
    %v183 = vld [vmem:[#allocation8 + $0x148] sm:$0xff]
    %v184 = vld [vmem:[#allocation8 + $0x150] sm:$0xff]
    %v185 = vld [vmem:[#allocation8 + $0x158] sm:$0xff]
    %v186 = vld [vmem:[#allocation8 + $0x160] sm:$0xff]
    %v187 = vld [vmem:[#allocation8 + $0x168] sm:$0xff]
    %v188 = vld [vmem:[#allocation8 + $0x170] sm:$0xff]
    %v189 = vld [vmem:[#allocation8 + $0x178] sm:$0xff]
    %v190 = vld [vmem:[#allocation8 + $0x180] sm:$0xff]
    %v191 = vld [vmem:[#allocation8 + $0x188] sm:$0xff]
    %v192 = vld [vmem:[#allocation8 + $0x190] sm:$0xff]
    %v193 = vld [vmem:[#allocation8 + $0x198] sm:$0xff]
    %v194 = vld [vmem:[#allocation8 + $0x1a0] sm:$0xff]
    %v195 = vld [vmem:[#allocation8 + $0x1a8] sm:$0xff]
    %v196 = vld [vmem:[#allocation8 + $0x1b0] sm:$0xff]
    %v197 = vld [vmem:[#allocation8 + $0x1b8] sm:$0xff]
    %v198 = vld [vmem:[#allocation8 + $0x1c0] sm:$0xff]
    %v199 = vld [vmem:[#allocation8 + $0x1c8] sm:$0xff]
    %v200 = vld [vmem:[#allocation8 + $0x1d0] sm:$0xff]
    %v201 = vld [vmem:[#allocation8 + $0x1d8] sm:$0xff]
    %v206 = vunpack.c.l.b16 %v138
    %v207 = vunpack.c.h.b16 %v138
    %v208 = vunpack.c.l.b16 %v139
    %v209 = vunpack.c.h.b16 %v139
    %v210 = vunpack.c.l.b16 %v140
    %v211 = vunpack.c.h.b16 %v140
    %v212 = vunpack.c.l.b16 %v141
    %v213 = vunpack.c.h.b16 %v141
    %v214 = vpack.c.b16 %v208, %v206
    %v215 = vpack.c.b16 %v209, %v207
    %v216 = vpack.c.b16 %v212, %v210
    %v217 = vpack.c.b16 %v213, %v211
    %v280 = vunpack.c.l.b16 %v142
    %v281 = vunpack.c.h.b16 %v142
    %v282 = vunpack.c.l.b16 %v143
    %v283 = vunpack.c.h.b16 %v143
    %v284 = vunpack.c.l.b16 %v144
    %v285 = vunpack.c.h.b16 %v144
    %v286 = vunpack.c.l.b16 %v145
    %v287 = vunpack.c.h.b16 %v145
    %v288 = vunpack.c.l.b16 %v146
    %v289 = vunpack.c.h.b16 %v146
    %v290 = vunpack.c.l.b16 %v147
    %v291 = vunpack.c.h.b16 %v147
    %v292 = vunpack.c.l.b16 %v148
    %v293 = vunpack.c.h.b16 %v148
    %v294 = vunpack.c.l.b16 %v149
    %v295 = vunpack.c.h.b16 %v149
    %v296 = vunpack.c.l.b16 %v150
    %v297 = vunpack.c.h.b16 %v150
    %v298 = vunpack.c.l.b16 %v151
    %v299 = vunpack.c.h.b16 %v151
    %v300 = vunpack.c.l.b16 %v152
    %v301 = vunpack.c.h.b16 %v152
    %v302 = vunpack.c.l.b16 %v153
    %v303 = vunpack.c.h.b16 %v153
    %v304 = vunpack.c.l.b16 %v154
    %v305 = vunpack.c.h.b16 %v154
    %v306 = vunpack.c.l.b16 %v155
    %v307 = vunpack.c.h.b16 %v155
    %v308 = vunpack.c.l.b16 %v156
    %v309 = vunpack.c.h.b16 %v156
    %v310 = vunpack.c.l.b16 %v157
    %v311 = vunpack.c.h.b16 %v157
    %v312 = vunpack.c.l.b16 %v158
    %v313 = vunpack.c.h.b16 %v158
    %v314 = vunpack.c.l.b16 %v159
    %v315 = vunpack.c.h.b16 %v159
    %v316 = vunpack.c.l.b16 %v160
    %v317 = vunpack.c.h.b16 %v160
    %v318 = vunpack.c.l.b16 %v161
    %v319 = vunpack.c.h.b16 %v161
    %v320 = vunpack.c.l.b16 %v162
    %v321 = vunpack.c.h.b16 %v162
    %v322 = vunpack.c.l.b16 %v163
    %v323 = vunpack.c.h.b16 %v163
    %v324 = vunpack.c.l.b16 %v164
    %v325 = vunpack.c.h.b16 %v164
    %v326 = vunpack.c.l.b16 %v165
    %v327 = vunpack.c.h.b16 %v165
    %v328 = vunpack.c.l.b16 %v166
    %v329 = vunpack.c.h.b16 %v166
    %v330 = vunpack.c.l.b16 %v167
    %v331 = vunpack.c.h.b16 %v167
    %v332 = vunpack.c.l.b16 %v168
    %v333 = vunpack.c.h.b16 %v168
    %v334 = vunpack.c.l.b16 %v169
    %v335 = vunpack.c.h.b16 %v169
    %v336 = vunpack.c.l.b16 %v170
    %v337 = vunpack.c.h.b16 %v170
    %v338 = vunpack.c.l.b16 %v171
    %v339 = vunpack.c.h.b16 %v171
    %v340 = vunpack.c.l.b16 %v172
    %v341 = vunpack.c.h.b16 %v172
    %v342 = vunpack.c.l.b16 %v173
    %v343 = vunpack.c.h.b16 %v173
    %v344 = vunpack.c.l.b16 %v174
    %v345 = vunpack.c.h.b16 %v174
    %v346 = vunpack.c.l.b16 %v175
    %v347 = vunpack.c.h.b16 %v175
    %v348 = vunpack.c.l.b16 %v176
    %v349 = vunpack.c.h.b16 %v176
    %v350 = vunpack.c.l.b16 %v177
    %v351 = vunpack.c.h.b16 %v177
    %v352 = vunpack.c.l.b16 %v178
    %v353 = vunpack.c.h.b16 %v178
    %v354 = vunpack.c.l.b16 %v179
    %v355 = vunpack.c.h.b16 %v179
    %v356 = vunpack.c.l.b16 %v180
    %v357 = vunpack.c.h.b16 %v180
    %v358 = vunpack.c.l.b16 %v181
    %v359 = vunpack.c.h.b16 %v181
    %v360 = vunpack.c.l.b16 %v182
    %v361 = vunpack.c.h.b16 %v182
    %v362 = vunpack.c.l.b16 %v183
    %v363 = vunpack.c.h.b16 %v183
    %v364 = vunpack.c.l.b16 %v184
    %v365 = vunpack.c.h.b16 %v184
    %v366 = vunpack.c.l.b16 %v185
    %v367 = vunpack.c.h.b16 %v185
    %v368 = vunpack.c.l.b16 %v186
    %v369 = vunpack.c.h.b16 %v186
    %v370 = vunpack.c.l.b16 %v187
    %v371 = vunpack.c.h.b16 %v187
    %v372 = vunpack.c.l.b16 %v188
    %v373 = vunpack.c.h.b16 %v188
    %v374 = vunpack.c.l.b16 %v189
    %v375 = vunpack.c.h.b16 %v189
    %v376 = vunpack.c.l.b16 %v190
    %v377 = vunpack.c.h.b16 %v190
    %v378 = vunpack.c.l.b16 %v191
    %v379 = vunpack.c.h.b16 %v191
    %v380 = vunpack.c.l.b16 %v192
    %v381 = vunpack.c.h.b16 %v192
    %v382 = vunpack.c.l.b16 %v193
    %v383 = vunpack.c.h.b16 %v193
    %v384 = vunpack.c.l.b16 %v194
    %v385 = vunpack.c.h.b16 %v194
    %v386 = vunpack.c.l.b16 %v195
    %v387 = vunpack.c.h.b16 %v195
    %v388 = vunpack.c.l.b16 %v196
    %v389 = vunpack.c.h.b16 %v196
    %v390 = vunpack.c.l.b16 %v197
    %v391 = vunpack.c.h.b16 %v197
    %v392 = vunpack.c.l.b16 %v198
    %v393 = vunpack.c.h.b16 %v198
    %v394 = vunpack.c.l.b16 %v199
    %v395 = vunpack.c.h.b16 %v199
    %v396 = vunpack.c.l.b16 %v200
    %v397 = vunpack.c.h.b16 %v200
    %v398 = vunpack.c.l.b16 %v201
    %v399 = vunpack.c.h.b16 %v201
    %v400 = vpack.c.b16 %v284, %v280
    %v401 = vpack.c.b16 %v285, %v281
    %v402 = vpack.c.b16 %v286, %v282
    %v403 = vpack.c.b16 %v287, %v283
    %v404 = vpack.c.b16 %v292, %v288
    %v405 = vpack.c.b16 %v293, %v289
    %v406 = vpack.c.b16 %v294, %v290
    %v407 = vpack.c.b16 %v295, %v291
    %v408 = vpack.c.b16 %v300, %v296
    %v409 = vpack.c.b16 %v301, %v297
    %v410 = vpack.c.b16 %v302, %v298
    %v411 = vpack.c.b16 %v303, %v299
    %v412 = vpack.c.b16 %v308, %v304
    %v413 = vpack.c.b16 %v309, %v305
    %v414 = vpack.c.b16 %v310, %v306
    %v415 = vpack.c.b16 %v311, %v307
    %v416 = vpack.c.b16 %v316, %v312
    %v417 = vpack.c.b16 %v317, %v313
    %v418 = vpack.c.b16 %v318, %v314
    %v419 = vpack.c.b16 %v319, %v315
    %v420 = vpack.c.b16 %v324, %v320
    %v421 = vpack.c.b16 %v325, %v321
    %v422 = vpack.c.b16 %v326, %v322
    %v423 = vpack.c.b16 %v327, %v323
    %v424 = vpack.c.b16 %v332, %v328
    %v425 = vpack.c.b16 %v333, %v329
    %v426 = vpack.c.b16 %v334, %v330
    %v427 = vpack.c.b16 %v335, %v331
    %v428 = vpack.c.b16 %v340, %v336
    %v429 = vpack.c.b16 %v341, %v337
    %v430 = vpack.c.b16 %v342, %v338
    %v431 = vpack.c.b16 %v343, %v339
    %v432 = vpack.c.b16 %v348, %v344
    %v433 = vpack.c.b16 %v349, %v345
    %v434 = vpack.c.b16 %v350, %v346
    %v435 = vpack.c.b16 %v351, %v347
    %v436 = vpack.c.b16 %v356, %v352
    %v437 = vpack.c.b16 %v357, %v353
    %v438 = vpack.c.b16 %v358, %v354
    %v439 = vpack.c.b16 %v359, %v355
    %v440 = vpack.c.b16 %v364, %v360
    %v441 = vpack.c.b16 %v365, %v361
    %v442 = vpack.c.b16 %v366, %v362
    %v443 = vpack.c.b16 %v367, %v363
    %v444 = vpack.c.b16 %v372, %v368
    %v445 = vpack.c.b16 %v373, %v369
    %v446 = vpack.c.b16 %v374, %v370
    %v447 = vpack.c.b16 %v375, %v371
    %v448 = vpack.c.b16 %v380, %v376
    %v449 = vpack.c.b16 %v381, %v377
    %v450 = vpack.c.b16 %v382, %v378
    %v451 = vpack.c.b16 %v383, %v379
    %v452 = vpack.c.b16 %v388, %v384
    %v453 = vpack.c.b16 %v389, %v385
    %v454 = vpack.c.b16 %v390, %v386
    %v455 = vpack.c.b16 %v391, %v387
    %v456 = vpack.c.b16 %v396, %v392
    %v457 = vpack.c.b16 %v397, %v393
    %v458 = vpack.c.b16 %v398, %v394
    %v459 = vpack.c.b16 %v399, %v395
    %vm520 = vcmask 916480
    %v522 = vsel %vm520, %v215, 0
    %v525 = vsel %vm520, %v217, 0
    %527 = vmatprep.subr.bf16.mxu0 %v401
    %528 = vmatpush1.bf16.msra.mxu0 %v400
    %529 = vmatprep.subr.bf16.mxu0 %v405
    %530 = vmatpush1.bf16.msra.mxu0 %v404
    %531 = vmatprep.subr.bf16.mxu0 %v409
    %532 = vmatpush1.bf16.msra.mxu0 %v408
    %533 = vmatprep.subr.bf16.mxu0 %v413
    %534 = vmatpush1.bf16.msra.mxu0 %v412
    %535 = vmatprep.subr.bf16.mxu0 %v417
    %536 = vmatpush1.bf16.msra.mxu0 %v416
    %537 = vmatprep.subr.bf16.mxu0 %v421
    %538 = vmatpush1.bf16.msra.mxu0 %v420
    %539 = vmatprep.subr.bf16.mxu0 %v425
    %540 = vmatpush1.bf16.msra.mxu0 %v424
    %541 = vmatprep.subr.bf16.mxu0 %v429
    %542 = vmatpush1.bf16.msra.mxu0 %v428
    %543 = vmatprep.subr.bf16.mxu0 %v433
    %544 = vmatpush1.bf16.msra.mxu0 %v432
    %545 = vmatprep.subr.bf16.mxu0 %v437
    %546 = vmatpush1.bf16.msra.mxu0 %v436
    %547 = vmatprep.subr.bf16.mxu0 %v441
    %548 = vmatpush1.bf16.msra.mxu0 %v440
    %549 = vmatprep.subr.bf16.mxu0 %v445
    %550 = vmatpush1.bf16.msra.mxu0 %v444
    %551 = vmatprep.subr.bf16.mxu0 %v449
    %552 = vmatpush1.bf16.msra.mxu0 %v448
    %553 = vmatprep.subr.bf16.mxu0 %v453
    %554 = vmatpush1.bf16.msra.mxu0 %v452
    %555 = vmatprep.subr.bf16.mxu0 %v457
    %556 = vmatpush1.bf16.msra.mxu0 %v456
    %557 = vmatprep.subr.bf16.mxu0 0
    %558 = vmatpush1.bf16.msra.mxu0 0
    %559 = vmatprep.mubr.bf16.mxu0 %v522
    %560 = vmatmul.mubr.bf16.gmra.mrb[0].mxu0 %v214
    %v561 = vpop.f32.mrb[0].mxu0
    %v562 = vadd.f32 0.0, %v561
    %v563 = vpop.f32.mrb[0].mxu0
    %v564 = vadd.f32 0.0, %v563
    %v565 = vpop.f32.mrb[0].mxu0
    %v566 = vadd.f32 0.0, %v565
    %v567 = vpop.f32.mrb[0].mxu0
    %v568 = vadd.f32 0.0, %v567
    %569 = vmatprep.mubr.bf16.mxu0 %v525
    %570 = vmatmul.mubr.bf16.gmra.mrb[0].mxu0 %v216
    %v571 = vpop.f32.mrb[0].mxu0
    %v572 = vadd.f32 0.0, %v571
    %v573 = vpop.f32.mrb[0].mxu0
    %v574 = vadd.f32 0.0, %v573
    %v575 = vpop.f32.mrb[0].mxu0
    %v576 = vadd.f32 0.0, %v575
    %v577 = vpop.f32.mrb[0].mxu0
    %v578 = vadd.f32 0.0, %v577
    %579 = vdwg.mxu0
    %580 = vmatprep.subr.bf16.mxu0 %v403
    %581 = vmatpush1.bf16.msra.mxu0 %v402
    %582 = vmatprep.subr.bf16.mxu0 %v407
    %583 = vmatpush1.bf16.msra.mxu0 %v406
    %584 = vmatprep.subr.bf16.mxu0 %v411
    %585 = vmatpush1.bf16.msra.mxu0 %v410
    %586 = vmatprep.subr.bf16.mxu0 %v415
    %587 = vmatpush1.bf16.msra.mxu0 %v414
    %588 = vmatprep.subr.bf16.mxu0 %v419
    %589 = vmatpush1.bf16.msra.mxu0 %v418
    %590 = vmatprep.subr.bf16.mxu0 %v423
    %591 = vmatpush1.bf16.msra.mxu0 %v422
    %592 = vmatprep.subr.bf16.mxu0 %v427
    %593 = vmatpush1.bf16.msra.mxu0 %v426
    %594 = vmatprep.subr.bf16.mxu0 %v431
    %595 = vmatpush1.bf16.msra.mxu0 %v430
    %596 = vmatprep.subr.bf16.mxu0 %v435
    %597 = vmatpush1.bf16.msra.mxu0 %v434
    %598 = vmatprep.subr.bf16.mxu0 %v439
    %599 = vmatpush1.bf16.msra.mxu0 %v438
    %600 = vmatprep.subr.bf16.mxu0 %v443
    %601 = vmatpush1.bf16.msra.mxu0 %v442
    %602 = vmatprep.subr.bf16.mxu0 %v447
    %603 = vmatpush1.bf16.msra.mxu0 %v446
    %604 = vmatprep.subr.bf16.mxu0 %v451
    %605 = vmatpush1.bf16.msra.mxu0 %v450
    %606 = vmatprep.subr.bf16.mxu0 %v455
    %607 = vmatpush1.bf16.msra.mxu0 %v454
    %608 = vmatprep.subr.bf16.mxu0 %v459
    %609 = vmatpush1.bf16.msra.mxu0 %v458
    %610 = vmatprep.subr.bf16.mxu0 0
    %611 = vmatpush1.bf16.msra.mxu0 0
    %612 = vmatprep.mubr.bf16.mxu0 %v522
    %613 = vmatmul.mubr.bf16.gmra.mrb[0].mxu0 %v214
    %v614 = vpop.f32.mrb[0].mxu0
    %v615 = vadd.f32 0.0, %v614
    %v616 = vpop.f32.mrb[0].mxu0
    %v617 = vadd.f32 0.0, %v616
    %v618 = vpop.f32.mrb[0].mxu0
    %v619 = vadd.f32 0.0, %v618
    %v620 = vpop.f32.mrb[0].mxu0
    %v621 = vadd.f32 0.0, %v620
    %622 = vmatprep.mubr.bf16.mxu0 %v525
    %623 = vmatmul.mubr.bf16.gmra.mrb[0].mxu0 %v216
    %v624 = vpop.f32.mrb[0].mxu0
    %v625 = vadd.f32 0.0, %v624
    %v626 = vpop.f32.mrb[0].mxu0
    %v627 = vadd.f32 0.0, %v626
    %v628 = vpop.f32.mrb[0].mxu0
    %v629 = vadd.f32 0.0, %v628
    %v630 = vpop.f32.mrb[0].mxu0
    %v631 = vadd.f32 0.0, %v630
    %632 = vdwg.mxu0
    %v637 = vunpack.c.l.b16 %v74
    %v638 = vunpack.c.h.b16 %v74
    %v639 = vunpack.c.l.b16 %v75
    %v640 = vunpack.c.h.b16 %v75
    %v641 = vunpack.c.l.b16 %v76
    %v642 = vunpack.c.h.b16 %v76
    %v643 = vunpack.c.l.b16 %v77
    %v644 = vunpack.c.h.b16 %v77
    %v645 = vpack.c.b16 %v639, %v637
    %v646 = vpack.c.b16 %v640, %v638
    %v647 = vpack.c.b16 %v643, %v641
    %v648 = vpack.c.b16 %v644, %v642
    %v711 = vunpack.c.l.b16 %v78
    %v712 = vunpack.c.h.b16 %v78
    %v713 = vunpack.c.l.b16 %v79
    %v714 = vunpack.c.h.b16 %v79
    %v715 = vunpack.c.l.b16 %v80
    %v716 = vunpack.c.h.b16 %v80
    %v717 = vunpack.c.l.b16 %v81
    %v718 = vunpack.c.h.b16 %v81
    %v719 = vunpack.c.l.b16 %v82
    %v720 = vunpack.c.h.b16 %v82
    %v721 = vunpack.c.l.b16 %v83
    %v722 = vunpack.c.h.b16 %v83
    %v723 = vunpack.c.l.b16 %v84
    %v724 = vunpack.c.h.b16 %v84
    %v725 = vunpack.c.l.b16 %v85
    %v726 = vunpack.c.h.b16 %v85
    %v727 = vunpack.c.l.b16 %v86
    %v728 = vunpack.c.h.b16 %v86
    %v729 = vunpack.c.l.b16 %v87
    %v730 = vunpack.c.h.b16 %v87
    %v731 = vunpack.c.l.b16 %v88
    %v732 = vunpack.c.h.b16 %v88
    %v733 = vunpack.c.l.b16 %v89
    %v734 = vunpack.c.h.b16 %v89
    %v735 = vunpack.c.l.b16 %v90
    %v736 = vunpack.c.h.b16 %v90
    %v737 = vunpack.c.l.b16 %v91
    %v738 = vunpack.c.h.b16 %v91
    %v739 = vunpack.c.l.b16 %v92
    %v740 = vunpack.c.h.b16 %v92
    %v741 = vunpack.c.l.b16 %v93
    %v742 = vunpack.c.h.b16 %v93
    %v743 = vunpack.c.l.b16 %v94
    %v744 = vunpack.c.h.b16 %v94
    %v745 = vunpack.c.l.b16 %v95
    %v746 = vunpack.c.h.b16 %v95
    %v747 = vunpack.c.l.b16 %v96
    %v748 = vunpack.c.h.b16 %v96
    %v749 = vunpack.c.l.b16 %v97
    %v750 = vunpack.c.h.b16 %v97
    %v751 = vunpack.c.l.b16 %v98
    %v752 = vunpack.c.h.b16 %v98
    %v753 = vunpack.c.l.b16 %v99
    %v754 = vunpack.c.h.b16 %v99
    %v755 = vunpack.c.l.b16 %v100
    %v756 = vunpack.c.h.b16 %v100
    %v757 = vunpack.c.l.b16 %v101
    %v758 = vunpack.c.h.b16 %v101
    %v759 = vunpack.c.l.b16 %v102
    %v760 = vunpack.c.h.b16 %v102
    %v761 = vunpack.c.l.b16 %v103
    %v762 = vunpack.c.h.b16 %v103
    %v763 = vunpack.c.l.b16 %v104
    %v764 = vunpack.c.h.b16 %v104
    %v765 = vunpack.c.l.b16 %v105
    %v766 = vunpack.c.h.b16 %v105
    %v767 = vunpack.c.l.b16 %v106
    %v768 = vunpack.c.h.b16 %v106
    %v769 = vunpack.c.l.b16 %v107
    %v770 = vunpack.c.h.b16 %v107
    %v771 = vunpack.c.l.b16 %v108
    %v772 = vunpack.c.h.b16 %v108
    %v773 = vunpack.c.l.b16 %v109
    %v774 = vunpack.c.h.b16 %v109
    %v775 = vunpack.c.l.b16 %v110
    %v776 = vunpack.c.h.b16 %v110
    %v777 = vunpack.c.l.b16 %v111
    %v778 = vunpack.c.h.b16 %v111
    %v779 = vunpack.c.l.b16 %v112
    %v780 = vunpack.c.h.b16 %v112
    %v781 = vunpack.c.l.b16 %v113
    %v782 = vunpack.c.h.b16 %v113
    %v783 = vunpack.c.l.b16 %v114
    %v784 = vunpack.c.h.b16 %v114
    %v785 = vunpack.c.l.b16 %v115
    %v786 = vunpack.c.h.b16 %v115
    %v787 = vunpack.c.l.b16 %v116
    %v788 = vunpack.c.h.b16 %v116
    %v789 = vunpack.c.l.b16 %v117
    %v790 = vunpack.c.h.b16 %v117
    %v791 = vunpack.c.l.b16 %v118
    %v792 = vunpack.c.h.b16 %v118
    %v793 = vunpack.c.l.b16 %v119
    %v794 = vunpack.c.h.b16 %v119
    %v795 = vunpack.c.l.b16 %v120
    %v796 = vunpack.c.h.b16 %v120
    %v797 = vunpack.c.l.b16 %v121
    %v798 = vunpack.c.h.b16 %v121
    %v799 = vunpack.c.l.b16 %v122
    %v800 = vunpack.c.h.b16 %v122
    %v801 = vunpack.c.l.b16 %v123
    %v802 = vunpack.c.h.b16 %v123
    %v803 = vunpack.c.l.b16 %v124
    %v804 = vunpack.c.h.b16 %v124
    %v805 = vunpack.c.l.b16 %v125
    %v806 = vunpack.c.h.b16 %v125
    %v807 = vunpack.c.l.b16 %v126
    %v808 = vunpack.c.h.b16 %v126
    %v809 = vunpack.c.l.b16 %v127
    %v810 = vunpack.c.h.b16 %v127
    %v811 = vunpack.c.l.b16 %v128
    %v812 = vunpack.c.h.b16 %v128
    %v813 = vunpack.c.l.b16 %v129
    %v814 = vunpack.c.h.b16 %v129
    %v815 = vunpack.c.l.b16 %v130
    %v816 = vunpack.c.h.b16 %v130
    %v817 = vunpack.c.l.b16 %v131
    %v818 = vunpack.c.h.b16 %v131
    %v819 = vunpack.c.l.b16 %v132
    %v820 = vunpack.c.h.b16 %v132
    %v821 = vunpack.c.l.b16 %v133
    %v822 = vunpack.c.h.b16 %v133
    %v823 = vunpack.c.l.b16 %v134
    %v824 = vunpack.c.h.b16 %v134
    %v825 = vunpack.c.l.b16 %v135
    %v826 = vunpack.c.h.b16 %v135
    %v827 = vunpack.c.l.b16 %v136
    %v828 = vunpack.c.h.b16 %v136
    %v829 = vunpack.c.l.b16 %v137
    %v830 = vunpack.c.h.b16 %v137
    %v831 = vpack.c.b16 %v715, %v711
    %v832 = vpack.c.b16 %v716, %v712
    %v833 = vpack.c.b16 %v717, %v713
    %v834 = vpack.c.b16 %v718, %v714
    %v835 = vpack.c.b16 %v723, %v719
    %v836 = vpack.c.b16 %v724, %v720
    %v837 = vpack.c.b16 %v725, %v721
    %v838 = vpack.c.b16 %v726, %v722
    %v839 = vpack.c.b16 %v731, %v727
    %v840 = vpack.c.b16 %v732, %v728
    %v841 = vpack.c.b16 %v733, %v729
    %v842 = vpack.c.b16 %v734, %v730
    %v843 = vpack.c.b16 %v739, %v735
    %v844 = vpack.c.b16 %v740, %v736
    %v845 = vpack.c.b16 %v741, %v737
    %v846 = vpack.c.b16 %v742, %v738
    %v847 = vpack.c.b16 %v747, %v743
    %v848 = vpack.c.b16 %v748, %v744
    %v849 = vpack.c.b16 %v749, %v745
    %v850 = vpack.c.b16 %v750, %v746
    %v851 = vpack.c.b16 %v755, %v751
    %v852 = vpack.c.b16 %v756, %v752
    %v853 = vpack.c.b16 %v757, %v753
    %v854 = vpack.c.b16 %v758, %v754
    %v855 = vpack.c.b16 %v763, %v759
    %v856 = vpack.c.b16 %v764, %v760
    %v857 = vpack.c.b16 %v765, %v761
    %v858 = vpack.c.b16 %v766, %v762
    %v859 = vpack.c.b16 %v771, %v767
    %v860 = vpack.c.b16 %v772, %v768
    %v861 = vpack.c.b16 %v773, %v769
    %v862 = vpack.c.b16 %v774, %v770
    %v863 = vpack.c.b16 %v779, %v775
    %v864 = vpack.c.b16 %v780, %v776
    %v865 = vpack.c.b16 %v781, %v777
    %v866 = vpack.c.b16 %v782, %v778
    %v867 = vpack.c.b16 %v787, %v783
    %v868 = vpack.c.b16 %v788, %v784
    %v869 = vpack.c.b16 %v789, %v785
    %v870 = vpack.c.b16 %v790, %v786
    %v871 = vpack.c.b16 %v795, %v791
    %v872 = vpack.c.b16 %v796, %v792
    %v873 = vpack.c.b16 %v797, %v793
    %v874 = vpack.c.b16 %v798, %v794
    %v875 = vpack.c.b16 %v803, %v799
    %v876 = vpack.c.b16 %v804, %v800
    %v877 = vpack.c.b16 %v805, %v801
    %v878 = vpack.c.b16 %v806, %v802
    %v879 = vpack.c.b16 %v811, %v807
    %v880 = vpack.c.b16 %v812, %v808
    %v881 = vpack.c.b16 %v813, %v809
    %v882 = vpack.c.b16 %v814, %v810
    %v883 = vpack.c.b16 %v819, %v815
    %v884 = vpack.c.b16 %v820, %v816
    %v885 = vpack.c.b16 %v821, %v817
    %v886 = vpack.c.b16 %v822, %v818
    %v887 = vpack.c.b16 %v827, %v823
    %v888 = vpack.c.b16 %v828, %v824
    %v889 = vpack.c.b16 %v829, %v825
    %v890 = vpack.c.b16 %v830, %v826
    %v952 = vsel %vm520, %v646, 0
    %v955 = vsel %vm520, %v648, 0
    %957 = vmatprep.subr.bf16.mxu0 %v832
    %958 = vmatpush1.bf16.msra.mxu0 %v831
    %959 = vmatprep.subr.bf16.mxu0 %v836
    %960 = vmatpush1.bf16.msra.mxu0 %v835
    %961 = vmatprep.subr.bf16.mxu0 %v840
    %962 = vmatpush1.bf16.msra.mxu0 %v839
    %963 = vmatprep.subr.bf16.mxu0 %v844
    %964 = vmatpush1.bf16.msra.mxu0 %v843
    %965 = vmatprep.subr.bf16.mxu0 %v848
    %966 = vmatpush1.bf16.msra.mxu0 %v847
    %967 = vmatprep.subr.bf16.mxu0 %v852
    %968 = vmatpush1.bf16.msra.mxu0 %v851
    %969 = vmatprep.subr.bf16.mxu0 %v856
    %970 = vmatpush1.bf16.msra.mxu0 %v855
    %971 = vmatprep.subr.bf16.mxu0 %v860
    %972 = vmatpush1.bf16.msra.mxu0 %v859
    %973 = vmatprep.subr.bf16.mxu0 %v864
    %974 = vmatpush1.bf16.msra.mxu0 %v863
    %975 = vmatprep.subr.bf16.mxu0 %v868
    %976 = vmatpush1.bf16.msra.mxu0 %v867
    %977 = vmatprep.subr.bf16.mxu0 %v872
    %978 = vmatpush1.bf16.msra.mxu0 %v871
    %979 = vmatprep.subr.bf16.mxu0 %v876
    %980 = vmatpush1.bf16.msra.mxu0 %v875
    %981 = vmatprep.subr.bf16.mxu0 %v880
    %982 = vmatpush1.bf16.msra.mxu0 %v879
    %983 = vmatprep.subr.bf16.mxu0 %v884
    %984 = vmatpush1.bf16.msra.mxu0 %v883
    %985 = vmatprep.subr.bf16.mxu0 %v888
    %986 = vmatpush1.bf16.msra.mxu0 %v887
    %987 = vmatprep.subr.bf16.mxu0 0
    %988 = vmatpush1.bf16.msra.mxu0 0
    %989 = vmatprep.mubr.bf16.mxu0 %v952
    %990 = vmatmul.mubr.bf16.gmra.mrb[0].mxu0 %v645
    %v991 = vpop.f32.mrb[0].mxu0
    %v992 = vadd.f32 %v562, %v991
    %v993 = vpop.f32.mrb[0].mxu0
    %v994 = vadd.f32 %v564, %v993
    %v995 = vpop.f32.mrb[0].mxu0
    %v996 = vadd.f32 %v566, %v995
    %v997 = vpop.f32.mrb[0].mxu0
    %v998 = vadd.f32 %v568, %v997
    %999 = vmatprep.mubr.bf16.mxu0 %v955
    %1000 = vmatmul.mubr.bf16.gmra.mrb[0].mxu0 %v647
    %v1001 = vpop.f32.mrb[0].mxu0
    %v1002 = vadd.f32 %v572, %v1001
    %v1003 = vpop.f32.mrb[0].mxu0
    %v1004 = vadd.f32 %v574, %v1003
    %v1005 = vpop.f32.mrb[0].mxu0
    %v1006 = vadd.f32 %v576, %v1005
    %v1007 = vpop.f32.mrb[0].mxu0
    %v1008 = vadd.f32 %v578, %v1007
    %1009 = vdwg.mxu0
    %1010 = vmatprep.subr.bf16.mxu0 %v834
    %1011 = vmatpush1.bf16.msra.mxu0 %v833
    %1012 = vmatprep.subr.bf16.mxu0 %v838
    %1013 = vmatpush1.bf16.msra.mxu0 %v837
    %1014 = vmatprep.subr.bf16.mxu0 %v842
    %1015 = vmatpush1.bf16.msra.mxu0 %v841
    %1016 = vmatprep.subr.bf16.mxu0 %v846
    %1017 = vmatpush1.bf16.msra.mxu0 %v845
    %1018 = vmatprep.subr.bf16.mxu0 %v850
    %1019 = vmatpush1.bf16.msra.mxu0 %v849
    %1020 = vmatprep.subr.bf16.mxu0 %v854
    %1021 = vmatpush1.bf16.msra.mxu0 %v853
    %1022 = vmatprep.subr.bf16.mxu0 %v858
    %1023 = vmatpush1.bf16.msra.mxu0 %v857
    %1024 = vmatprep.subr.bf16.mxu0 %v862
    %1025 = vmatpush1.bf16.msra.mxu0 %v861
    %1026 = vmatprep.subr.bf16.mxu0 %v866
    %1027 = vmatpush1.bf16.msra.mxu0 %v865
    %1028 = vmatprep.subr.bf16.mxu0 %v870
    %1029 = vmatpush1.bf16.msra.mxu0 %v869
    %1030 = vmatprep.subr.bf16.mxu0 %v874
    %1031 = vmatpush1.bf16.msra.mxu0 %v873
    %1032 = vmatprep.subr.bf16.mxu0 %v878
    %1033 = vmatpush1.bf16.msra.mxu0 %v877
    %1034 = vmatprep.subr.bf16.mxu0 %v882
    %1035 = vmatpush1.bf16.msra.mxu0 %v881
    %1036 = vmatprep.subr.bf16.mxu0 %v886
    %1037 = vmatpush1.bf16.msra.mxu0 %v885
    %1038 = vmatprep.subr.bf16.mxu0 %v890
    %1039 = vmatpush1.bf16.msra.mxu0 %v889
    %1040 = vmatprep.subr.bf16.mxu0 0
    %1041 = vmatpush1.bf16.msra.mxu0 0
    %1042 = vmatprep.mubr.bf16.mxu0 %v952
    %1043 = vmatmul.mubr.bf16.gmra.mrb[0].mxu0 %v645
    %v1044 = vpop.f32.mrb[0].mxu0
    %v1045 = vadd.f32 %v615, %v1044
    %v1046 = vpop.f32.mrb[0].mxu0
    %v1047 = vadd.f32 %v617, %v1046
    %v1048 = vpop.f32.mrb[0].mxu0
    %v1049 = vadd.f32 %v619, %v1048
    %v1050 = vpop.f32.mrb[0].mxu0
    %v1051 = vadd.f32 %v621, %v1050
    %1052 = vmatprep.mubr.bf16.mxu0 %v955
    %1053 = vmatmul.mubr.bf16.gmra.mrb[0].mxu0 %v647
    %v1054 = vpop.f32.mrb[0].mxu0
    %v1055 = vadd.f32 %v625, %v1054
    %v1056 = vpop.f32.mrb[0].mxu0
    %v1057 = vadd.f32 %v627, %v1056
    %v1058 = vpop.f32.mrb[0].mxu0
    %v1059 = vadd.f32 %v629, %v1058
    %v1060 = vpop.f32.mrb[0].mxu0
    %v1061 = vadd.f32 %v631, %v1060
    %1062 = vdwg.mxu0
    %1063 = vst [vmem:[#allocation10] sm:$0xff] %v992
    %1064 = vst [vmem:[#allocation10 + $0x8] sm:$0xff] %v994
    %1065 = vst [vmem:[#allocation10 + $0x10] sm:$0xff] %v1045
    %1066 = vst [vmem:[#allocation10 + $0x18] sm:$0xff] %v1047
    %1067 = vst [vmem:[#allocation10 + $0x20] sm:$0xff] %v996
    %1068 = vst [vmem:[#allocation10 + $0x28] sm:$0xff] %v998
    %1069 = vst [vmem:[#allocation10 + $0x30] sm:$0xff] %v1049
    %1070 = vst [vmem:[#allocation10 + $0x38] sm:$0xff] %v1051
    %1071 = vst [vmem:[#allocation10 + $0x40] sm:$0xff] %v1002
    %1072 = vst [vmem:[#allocation10 + $0x48] sm:$0xff] %v1004
    %1073 = vst [vmem:[#allocation10 + $0x50] sm:$0xff] %v1055
    %1074 = vst [vmem:[#allocation10 + $0x58] sm:$0xff] %v1057
    %1075 = vst [vmem:[#allocation10 + $0x60] sm:$0xff] %v1006
    %1076 = vst [vmem:[#allocation10 + $0x68] sm:$0xff] %v1008
    %1077 = vst [vmem:[#allocation10 + $0x70] sm:$0xff] %v1059
    %1078 = vst [vmem:[#allocation10 + $0x78] sm:$0xff] %v1061
    // Predicated region
    $region34: #{forward.1} parent=1 // pred_check
      _
    $region35: #{forward.1} parent=1 // pred_check_branch
      %1080 = sbr.rel (0) target = $region37
    $region36: #{forward.1} parent=1 // pred_region
      %s1082 = ssub.s32 2048, 1536
      %1083 = vsyncadd [#allocation4], %s1082
      %s1084 = sshll.u32 [#allocation10], 4
      %s1085 = int_to_ptr.vmem [resolvable:$true] %s1084
      %1090 = dma.vmem_to_hbm [thread:$0]  %s1085, 1536, %s4, [#allocation4], 512, 512, 32
    $region37: #{forward.1} parent=1 // pred_fallthru
      _
    // Predicated region
    $region38: #{forward.1} parent=1 // pred_check
      _
    $region39: #{forward.1} parent=1 // pred_check_branch
      %1092 = sbr.rel (0) target = $region41
    $region40: #{forward.1} parent=1 // pred_region
      %1093 = dma.done [#allocation4], 2048
    $region41: #{forward.1} parent=1 // pred_fallthru
      _
    %1094 = vsyncpa [#allocation3], 1
    %1095 = vsyncpa [#allocation6], 1
    %1096 = vsyncpa [#allocation9], 1
    %1097 = vsyncpa [#allocation4], 1

</llo_original>
